<compile_context>
chip_gen: v6e
topology: v6e:2x2x1
jax: 0.10.0
libtpu: 0.0.40
codegen_flags: <defaults>
</compile_context>

<pallas_src>
import numpy as np
import jax
import jax.numpy as jnp
from jax.experimental import pallas as pl
from jax.experimental.pallas import tpu as pltpu

LANES = 128


def _make_kernel(n_pred, tile_rows, out_rows, rows_per_plane, need_row_mask):
    """Kernel closure over static configuration (prediction count, tile geometry)."""

    def kernel(w_ref, gt_ref, mask_ref, *rest):
        pred_refs = rest[:n_pred]          # each (2, TR, 128): [mu; sigma]
        out_ref = rest[n_pred]             # (1, 1, OUT_ROWS, 128)

        gt = gt_ref[...]                   # (TR, 128) f32
        mask = mask_ref[...]               # (TR, 128) f32 {0,1}

        if need_row_mask:
            # Last row tile may extend past the valid rows: mask out-of-bounds rows
            # (their contents are unspecified, possibly NaN -> use where, not multiply).
            r = pl.program_id(1)
            row_ids = jax.lax.broadcasted_iota(jnp.int32, (tile_rows, LANES), 0)
            row_ok = (r * tile_rows + row_ids) < rows_per_plane

        acc = jnp.zeros((tile_rows, LANES), jnp.float32)
        for i in range(n_pred):            # static unroll over predictions
            mu = pred_refs[i][0]
            sigma = pred_refs[i][1]
            var = jnp.maximum(sigma * sigma, 1e-10)      # var[var < 1e-10] = 1e-10
            nll = jnp.square(mu - gt) / (2.0 * var) + 0.5 * jnp.log(var)
            term = nll * mask
            if need_row_mask:
                term = jnp.where(row_ok, term, 0.0)
            acc = acc + w_ref[i] * term    # w already includes gamma**k / count(mask)

        # Fold sublane groups with pure VPU adds; final scalar reduce happens in the
        # wrapper over the tiny partials array (no per-step XLU full reduction).
        partial = acc.reshape(tile_rows // out_rows, out_rows, LANES).sum(axis=0)
        out_ref[0, 0] = partial

    return kernel


def magnet_loss_pallas(pred_list, gt_depth, gt_depth_mask, gamma):
    """pred_list: list of [B, 2, H, W]; gt_depth: [B, 1, H, W]; mask: bool [B, 1, H, W]."""
    n = len(pred_list)
    B, c2, H, W = pred_list[0].shape
    assert c2 == 2, "each prediction must carry (mu, sigma) channels"
    HW = H * W

    # Hoist the masked-mean denominator out of the kernel and fold it into the weights.
    cnt = jnp.sum(gt_depth_mask.astype(jnp.float32))
    weights = jnp.asarray([gamma ** (n - 1 - i) for i in range(n)], jnp.float32) / cnt

    # Lane-dense views.  Reshapes of contiguous trailing dims are free; padding is only
    # needed when H*W is not a multiple of 128 (mask padded with 0 => no contribution).
    hw_pad = (-HW) % LANES
    preds = [p.astype(jnp.float32).reshape(B, 2, HW) for p in pred_list]
    gt = gt_depth.astype(jnp.float32).reshape(B, HW)
    mask = gt_depth_mask.astype(jnp.float32).reshape(B, HW)
    if hw_pad:
        preds = [jnp.pad(p, ((0, 0), (0, 0), (0, hw_pad))) for p in preds]
        gt = jnp.pad(gt, ((0, 0), (0, hw_pad)))
        mask = jnp.pad(mask, ((0, 0), (0, hw_pad)))
    RH = (HW + hw_pad) // LANES                      # rows per (batch, plane)

    preds = [p.reshape(B, 2, RH, LANES) for p in preds]
    gt = gt.reshape(B, RH, LANES)
    mask = mask.reshape(B, RH, LANES)

    # Row-tile size: multiple of 8 when possible, sized so (2n+2) double-buffered f32
    # input blocks stay within a few MiB (safe for v7x's smaller VMEM as well).
    bytes_per_row = (2 * n + 2) * LANES * 4
    tr_budget = max(8, (8 * 1024 * 1024) // (2 * bytes_per_row)) // 8 * 8
    if RH >= 8:
        TR = min(tr_budget, (RH // 8) * 8)
    else:
        TR = RH                                      # tiny plane: block == full dim
    NRT = pl.cdiv(RH, TR)
    OUT_ROWS = 8 if TR % 8 == 0 else TR
    need_row_mask = (RH % TR) != 0

    kernel = _make_kernel(n, TR, OUT_ROWS, RH, need_row_mask)

    pred_spec = pl.BlockSpec((None, 2, TR, LANES), lambda b, r: (b, 0, r, 0))
    plane_spec = pl.BlockSpec((None, TR, LANES), lambda b, r: (b, r, 0))
    out_spec = pl.BlockSpec((1, 1, OUT_ROWS, LANES), lambda b, r: (b, r, 0, 0))

    partials = pl.pallas_call(
        kernel,
        out_shape=jax.ShapeDtypeStruct((B, NRT, OUT_ROWS, LANES), jnp.float32),
        grid_spec=pltpu.PrefetchScalarGridSpec(
            num_scalar_prefetch=0,
            grid=(B, NRT),
            in_specs=[
                pl.BlockSpec(memory_space=pltpu.MemorySpace.SMEM),   # scaled weights (n,)
                plane_spec,                                          # gt
                plane_spec,                                          # mask
            ] + [pred_spec] * n,                                     # predictions
            out_specs=out_spec,
        ),
        compiler_params=pltpu.CompilerParams(
            dimension_semantics=("parallel", "parallel")),
    )(weights, gt, mask, *preds)

    # Tiny final reduction over the per-tile partials.
    return jnp.sum(partials)


def magnet_loss_ref(pred_list, gt_depth, gt_depth_mask, gamma):
    """Pure-JAX reference mirroring the PyTorch forward (gaussian branch)."""
    n = len(pred_list)
    gt = gt_depth.reshape(-1).astype(jnp.float32)
    m = gt_depth_mask.reshape(-1).astype(jnp.float32)
    cnt = jnp.sum(m)
    loss = 0.0
    for i in range(n):
        w = gamma ** (n - i - 1)
        mu = pred_list[i][:, 0].reshape(-1).astype(jnp.float32)
        sg = pred_list[i][:, 1].reshape(-1).astype(jnp.float32)
        var = jnp.maximum(sg * sg, 1e-10)
        nll = (mu - gt) ** 2 / (2.0 * var) + 0.5 * jnp.log(var)
        loss = loss + w * jnp.sum(nll * m) / cnt
    return loss


if __name__ == "__main__":
    def run_case(seed, B, H, W, n_predictions, gamma):
        key = jax.random.PRNGKey(seed)
        keys = jax.random.split(key, n_predictions + 2)
        pred_list = [jax.random.normal(keys[i], (B, 2, H, W), jnp.float32)
                     for i in range(n_predictions)]
        gt_depth = jax.random.uniform(keys[-2], (B, 1, H, W), jnp.float32,
                                      minval=0.1, maxval=5.0)
        gt_depth_mask = jax.random.uniform(keys[-1], (B, 1, H, W)) > 0.3
        out = jax.block_until_ready(
            magnet_loss_pallas(pred_list, gt_depth, gt_depth_mask, gamma))
        ref = jax.block_until_ready(
            magnet_loss_ref(pred_list, gt_depth, gt_depth_mask, gamma))
        assert np.allclose(np.asarray(out), np.asarray(ref), rtol=1e-4, atol=1e-4), \
            (seed, B, H, W, np.asarray(out), np.asarray(ref))

    # Base case implied by the module (seed 0).
    run_case(0, B=2, H=16, W=16, n_predictions=3, gamma=0.9)
    # Exercises the ragged row-tile path (RH=9, TR=8 -> in-kernel row bounds mask + fold).
    run_case(1, B=2, H=32, W=36, n_predictions=4, gamma=0.8)
    # Exercises the lane-padding fallback (H*W not a multiple of 128).
    run_case(2, B=2, H=10, W=10, n_predictions=3, gamma=0.9)

    print("KERNEL_OK")
</pallas_src>

<mosaic_0001>
module attributes {stable_mosaic.version = 11 : i64} {
  func.func @kernel(%arg0: i32, %arg1: i32, %arg2: memref<3xf32, #tpu.memory_space<smem>>, %arg3: memref<1x2x128xf32, #tpu.memory_space<vmem>>, %arg4: memref<1x2x128xf32, #tpu.memory_space<vmem>>, %arg5: memref<1x2x2x128xf32, #tpu.memory_space<vmem>>, %arg6: memref<1x2x2x128xf32, #tpu.memory_space<vmem>>, %arg7: memref<1x2x2x128xf32, #tpu.memory_space<vmem>>, %arg8: memref<1x1x2x128xf32, #tpu.memory_space<vmem>>) attributes {dimension_semantics = [#tpu.dimension_semantics<parallel>, #tpu.dimension_semantics<parallel>], iteration_bounds = array<i64: 2, 1>, scalar_prefetch = 0 : i64, scratch_operands = 0 : i64, tpu.core_type = #tpu.core_type<tc>, window_params = [{transform_indices = @transform_0, window_bounds = array<i64: 3>}, {transform_indices = @transform_1, window_bounds = array<i64: 1, 2, 128>}, {transform_indices = @transform_2, window_bounds = array<i64: 1, 2, 128>}, {transform_indices = @transform_3, window_bounds = array<i64: 1, 2, 2, 128>}, {transform_indices = @transform_4, window_bounds = array<i64: 1, 2, 2, 128>}, {transform_indices = @transform_5, window_bounds = array<i64: 1, 2, 2, 128>}, {transform_indices = @transform_6, window_bounds = array<i64: 1, 1, 2, 128>}]} {
    %c0 = arith.constant 0 : index
    %c0_0 = arith.constant 0 : index
    %c0_1 = arith.constant 0 : index
    %0 = vector.load %arg3[%c0, %c0_0, %c0_1] : memref<1x2x128xf32, #tpu.memory_space<vmem>>, vector<1x2x128xf32>
    %1 = vector.shape_cast %0 : vector<1x2x128xf32> to vector<2x128xf32>
    %c0_2 = arith.constant 0 : index
    %c0_3 = arith.constant 0 : index
    %c0_4 = arith.constant 0 : index
    %2 = vector.load %arg4[%c0_2, %c0_3, %c0_4] : memref<1x2x128xf32, #tpu.memory_space<vmem>>, vector<1x2x128xf32>
    %3 = vector.shape_cast %2 : vector<1x2x128xf32> to vector<2x128xf32>
    %cst = arith.constant 0.000000e+00 : f32
    %4 = vector.broadcast %cst : f32 to vector<2x128xf32>
    %c0_5 = arith.constant 0 : index
    %c0_6 = arith.constant 0 : index
    %c0_7 = arith.constant 0 : index
    %c0_8 = arith.constant 0 : index
    %5 = vector.load %arg5[%c0_5, %c0_6, %c0_7, %c0_8] : memref<1x2x2x128xf32, #tpu.memory_space<vmem>>, vector<1x1x2x128xf32>
    %6 = vector.shape_cast %5 : vector<1x1x2x128xf32> to vector<2x128xf32>
    %c0_9 = arith.constant 0 : index
    %c1 = arith.constant 1 : index
    %c0_10 = arith.constant 0 : index
    %c0_11 = arith.constant 0 : index
    %7 = vector.load %arg5[%c0_9, %c1, %c0_10, %c0_11] : memref<1x2x2x128xf32, #tpu.memory_space<vmem>>, vector<1x1x2x128xf32>
    %8 = vector.shape_cast %7 : vector<1x1x2x128xf32> to vector<2x128xf32>
    %9 = arith.mulf %8, %8 : vector<2x128xf32>
    %cst_12 = arith.constant 1.000000e-10 : f32
    %10 = vector.broadcast %cst_12 : f32 to vector<2x128xf32>
    %11 = arith.maximumf %9, %10 : vector<2x128xf32>
    %12 = arith.subf %6, %1 : vector<2x128xf32>
    %13 = arith.mulf %12, %12 : vector<2x128xf32>
    %cst_13 = arith.constant 2.000000e+00 : f32
    %14 = vector.broadcast %cst_13 : f32 to vector<2x128xf32>
    %15 = arith.mulf %14, %11 : vector<2x128xf32>
    %16 = arith.divf %13, %15 : vector<2x128xf32>
    %17 = math.log %11 : vector<2x128xf32>
    %cst_14 = arith.constant 5.000000e-01 : f32
    %18 = vector.broadcast %cst_14 : f32 to vector<2x128xf32>
    %19 = arith.mulf %18, %17 : vector<2x128xf32>
    %20 = arith.addf %16, %19 : vector<2x128xf32>
    %21 = arith.mulf %20, %3 : vector<2x128xf32>
    %c0_15 = arith.constant 0 : index
    %22 = memref.load %arg2[%c0_15] : memref<3xf32, #tpu.memory_space<smem>>
    %23 = vector.broadcast %22 : f32 to vector<2x128xf32>
    %24 = arith.mulf %23, %21 : vector<2x128xf32>
    %25 = arith.addf %4, %24 : vector<2x128xf32>
    %c0_16 = arith.constant 0 : index
    %c0_17 = arith.constant 0 : index
    %c0_18 = arith.constant 0 : index
    %c0_19 = arith.constant 0 : index
    %26 = vector.load %arg6[%c0_16, %c0_17, %c0_18, %c0_19] : memref<1x2x2x128xf32, #tpu.memory_space<vmem>>, vector<1x1x2x128xf32>
    %27 = vector.shape_cast %26 : vector<1x1x2x128xf32> to vector<2x128xf32>
    %c0_20 = arith.constant 0 : index
    %c1_21 = arith.constant 1 : index
    %c0_22 = arith.constant 0 : index
    %c0_23 = arith.constant 0 : index
    %28 = vector.load %arg6[%c0_20, %c1_21, %c0_22, %c0_23] : memref<1x2x2x128xf32, #tpu.memory_space<vmem>>, vector<1x1x2x128xf32>
    %29 = vector.shape_cast %28 : vector<1x1x2x128xf32> to vector<2x128xf32>
    %30 = arith.mulf %29, %29 : vector<2x128xf32>
    %cst_24 = arith.constant 1.000000e-10 : f32
    %31 = vector.broadcast %cst_24 : f32 to vector<2x128xf32>
    %32 = arith.maximumf %30, %31 : vector<2x128xf32>
    %33 = arith.subf %27, %1 : vector<2x128xf32>
    %34 = arith.mulf %33, %33 : vector<2x128xf32>
    %cst_25 = arith.constant 2.000000e+00 : f32
    %35 = vector.broadcast %cst_25 : f32 to vector<2x128xf32>
    %36 = arith.mulf %35, %32 : vector<2x128xf32>
    %37 = arith.divf %34, %36 : vector<2x128xf32>
    %38 = math.log %32 : vector<2x128xf32>
    %cst_26 = arith.constant 5.000000e-01 : f32
    %39 = vector.broadcast %cst_26 : f32 to vector<2x128xf32>
    %40 = arith.mulf %39, %38 : vector<2x128xf32>
    %41 = arith.addf %37, %40 : vector<2x128xf32>
    %42 = arith.mulf %41, %3 : vector<2x128xf32>
    %c1_27 = arith.constant 1 : index
    %43 = memref.load %arg2[%c1_27] : memref<3xf32, #tpu.memory_space<smem>>
    %44 = vector.broadcast %43 : f32 to vector<2x128xf32>
    %45 = arith.mulf %44, %42 : vector<2x128xf32>
    %46 = arith.addf %25, %45 : vector<2x128xf32>
    %c0_28 = arith.constant 0 : index
    %c0_29 = arith.constant 0 : index
    %c0_30 = arith.constant 0 : index
    %c0_31 = arith.constant 0 : index
    %47 = vector.load %arg7[%c0_28, %c0_29, %c0_30, %c0_31] : memref<1x2x2x128xf32, #tpu.memory_space<vmem>>, vector<1x1x2x128xf32>
    %48 = vector.shape_cast %47 : vector<1x1x2x128xf32> to vector<2x128xf32>
    %c0_32 = arith.constant 0 : index
    %c1_33 = arith.constant 1 : index
    %c0_34 = arith.constant 0 : index
    %c0_35 = arith.constant 0 : index
    %49 = vector.load %arg7[%c0_32, %c1_33, %c0_34, %c0_35] : memref<1x2x2x128xf32, #tpu.memory_space<vmem>>, vector<1x1x2x128xf32>
    %50 = vector.shape_cast %49 : vector<1x1x2x128xf32> to vector<2x128xf32>
    %51 = arith.mulf %50, %50 : vector<2x128xf32>
    %cst_36 = arith.constant 1.000000e-10 : f32
    %52 = vector.broadcast %cst_36 : f32 to vector<2x128xf32>
    %53 = arith.maximumf %51, %52 : vector<2x128xf32>
    %54 = arith.subf %48, %1 : vector<2x128xf32>
    %55 = arith.mulf %54, %54 : vector<2x128xf32>
    %cst_37 = arith.constant 2.000000e+00 : f32
    %56 = vector.broadcast %cst_37 : f32 to vector<2x128xf32>
    %57 = arith.mulf %56, %53 : vector<2x128xf32>
    %58 = arith.divf %55, %57 : vector<2x128xf32>
    %59 = math.log %53 : vector<2x128xf32>
    %cst_38 = arith.constant 5.000000e-01 : f32
    %60 = vector.broadcast %cst_38 : f32 to vector<2x128xf32>
    %61 = arith.mulf %60, %59 : vector<2x128xf32>
    %62 = arith.addf %58, %61 : vector<2x128xf32>
    %63 = arith.mulf %62, %3 : vector<2x128xf32>
    %c2 = arith.constant 2 : index
    %64 = memref.load %arg2[%c2] : memref<3xf32, #tpu.memory_space<smem>>
    %65 = vector.broadcast %64 : f32 to vector<2x128xf32>
    %66 = arith.mulf %65, %63 : vector<2x128xf32>
    %67 = arith.addf %46, %66 : vector<2x128xf32>
    %68 = vector.shape_cast %67 : vector<2x128xf32> to vector<1x2x128xf32>
    %cst_39 = arith.constant dense<0.000000e+00> : vector<2x128xf32>
    %69 = vector.multi_reduction <add>, %68, %cst_39 [0] : vector<1x2x128xf32> to vector<2x128xf32>
    %c0_40 = arith.constant 0 : index
    %c0_41 = arith.constant 0 : index
    %c0_42 = arith.constant 0 : index
    %c0_43 = arith.constant 0 : index
    %70 = vector.load %arg8[%c0_40, %c0_41, %c0_42, %c0_43] : memref<1x1x2x128xf32, #tpu.memory_space<vmem>>, vector<1x1x2x128xf32>
    %71 = vector.shape_cast %70 : vector<1x1x2x128xf32> to vector<2x128xf32>
    %72 = vector.shape_cast %69 : vector<2x128xf32> to vector<1x1x2x128xf32>
    tpu.vector_store %arg8[%c0_40, %c0_41, %c0_42, %c0_43], %72 {strides = array<i32>} : memref<1x1x2x128xf32, #tpu.memory_space<vmem>>, vector<1x1x2x128xf32>,
    return
  }
  func.func @transform_0(%arg0: i32, %arg1: i32) -> i32 {
    %c0_i32 = arith.constant 0 : i32
    %c0_i32_0 = arith.constant 0 : i32
    return %c0_i32 : i32
  }
  func.func @transform_1(%arg0: i32, %arg1: i32) -> (i32, i32, i32) {
    %c0_i32 = arith.constant 0 : i32
    %c0_i32_0 = arith.constant 0 : i32
    return %arg0, %arg1, %c0_i32 : i32, i32, i32
  }
  func.func @transform_2(%arg0: i32, %arg1: i32) -> (i32, i32, i32) {
    %c0_i32 = arith.constant 0 : i32
    %c0_i32_0 = arith.constant 0 : i32
    return %arg0, %arg1, %c0_i32 : i32, i32, i32
  }
  func.func @transform_3(%arg0: i32, %arg1: i32) -> (i32, i32, i32, i32) {
    %c0_i32 = arith.constant 0 : i32
    %c0_i32_0 = arith.constant 0 : i32
    %c0_i32_1 = arith.constant 0 : i32
    return %arg0, %c0_i32, %arg1, %c0_i32_0 : i32, i32, i32, i32
  }
  func.func @transform_4(%arg0: i32, %arg1: i32) -> (i32, i32, i32, i32) {
    %c0_i32 = arith.constant 0 : i32
    %c0_i32_0 = arith.constant 0 : i32
    %c0_i32_1 = arith.constant 0 : i32
    return %arg0, %c0_i32, %arg1, %c0_i32_0 : i32, i32, i32, i32
  }
  func.func @transform_5(%arg0: i32, %arg1: i32) -> (i32, i32, i32, i32) {
    %c0_i32 = arith.constant 0 : i32
    %c0_i32_0 = arith.constant 0 : i32
    %c0_i32_1 = arith.constant 0 : i32
    return %arg0, %c0_i32, %arg1, %c0_i32_0 : i32, i32, i32, i32
  }
  func.func @transform_6(%arg0: i32, %arg1: i32) -> (i32, i32, i32, i32) {
    %c0_i32 = arith.constant 0 : i32
    %c0_i32_0 = arith.constant 0 : i32
    %c0_i32_1 = arith.constant 0 : i32
    return %arg0, %arg1, %c0_i32, %c0_i32_0 : i32, i32, i32, i32
  }
}

</mosaic_0001>

<llo_original>
// kernel: tpu_custom_call.1
$region0: #{tpu_custom_call.1}
  #allocation0 [shape = 'u32[]', space=smem, size = 0x4, offset = 0x4, fixed_abs, tag = 'smem constant byte address 0x4 - core index']
  #allocation1 [shape = 'u32[144,128]{1,0:T(1,128)}', space=vmem, size = 0x12000, scoped, tag = 'internal scratch']
  %s0 = inlined_call_operand.hbm [shape: f32[3], index: 0, kind: input, shape index: {}]
  %s1 = inlined_call_operand.hbm [shape: f32[2,2,128], index: 1, kind: input, shape index: {}]
  %s2 = inlined_call_operand.hbm [shape: f32[2,2,128], index: 2, kind: input, shape index: {}]
  %s3 = inlined_call_operand.hbm [shape: f32[2,2,2,128], index: 3, kind: input, shape index: {}]
  %s4 = inlined_call_operand.hbm [shape: f32[2,2,2,128], index: 4, kind: input, shape index: {}]
  %s5 = inlined_call_operand.vmem [shape: f32[2,2,2,128], index: 5, kind: input, shape index: {}]
  %s6 = inlined_call_operand.hbm [shape: f32[2,1,2,128], index: 6, kind: output, shape index: {}]
  %s7 = sld [smem:[#allocation0]]
  $region77: #{tpu_custom_call.1} parent=0
    _
  %s9 = ssub.s32 1, %s7
  %s10 = scalar_select 0, %s9, %s7
  $region1: #{tpu_custom_call.1} parent=0
    #allocation2 [shape = 'u8[512]{0}', space=smem, size = 0x200, scoped, tag = 'input window, operand 0, single buffered']
    #allocation3 [shape = 's32[2]{0}', space=sflag, size = 0x8, scoped, tag = 'scoped memory for tpu_custom_call.1']
    #allocation4 [shape = 's32[2]{0}', space=sflag, size = 0x8, scoped, tag = 'scoped memory for tpu_custom_call.1']
    #allocation5 [shape = 's32[2]{0}', space=sflag, size = 0x8, scoped, tag = 'scoped memory for tpu_custom_call.1']
    #allocation6 [shape = 'u8[2048]{0}', space=vmem, size = 0x800, scoped, tag = 'input window, operand 1']
    #allocation7 [shape = 'u8[2048]{0}', space=vmem, size = 0x800, scoped, tag = 'input window, operand 2']
    #allocation8 [shape = 's32[2]{0}', space=sflag, size = 0x8, scoped, tag = 'scoped memory for tpu_custom_call.1']
    #allocation9 [shape = 'u8[4096]{0}', space=vmem, size = 0x1000, scoped, tag = 'input window, operand 3']
    #allocation10 [shape = 'u8[4096]{0}', space=vmem, size = 0x1000, scoped, tag = 'input window, operand 4']
    #allocation11 [shape = 's32[2]{0}', space=sflag, size = 0x8, scoped, tag = 'scoped memory for tpu_custom_call.1']
    #allocation12 [shape = 'u8[2048]{0}', space=vmem, size = 0x800, scoped, tag = 'output window, operand 0']
    %11 = vsyncpa [#allocation5], 0
    %12 = vsyncpa [#allocation3], 0
    %s13 = scalar_lea.sflag [#allocation3], 1
    %14 = vsyncpa %s13, 0
    %15 = vsyncpa [#allocation8], 0
    %s16 = scalar_lea.sflag [#allocation8], 1
    %17 = vsyncpa %s16, 0
    %18 = vsyncpa [#allocation11], 0
    %s19 = scalar_lea.sflag [#allocation11], 1
    %20 = vsyncpa %s19, 0
    %21 = vsyncpa [#allocation4], 0
    %s22 = scalar_lea.sflag [#allocation4], 1
    %23 = vsyncpa %s22, 0
    loop: start=0, step=1, limit=4
    $region2: #{tpu_custom_call.1} parent=1 // loop_pre_header
      _
    $region3: #{tpu_custom_call.1} parent=1 // loop_header
      %s25 = sphi 0, %s29
      %p26 = scmp.ge.s32.totalorder %s25, 4
      %s32 = sphi 0, %s44
      %s33 = sphi 0, %s40
      %s34 = sphi 0, %s32
      %s35 = sphi 0, %s33
      %s36 = sphi 0, %s34
      %s37 = sphi 0, %s35
      %s45 = sphi 0, %s45
      %s47 = sphi 0, %s45
      %s48 = sphi 0, %s47
      %s62 = sphi 0, %s48
      %s70 = sphi 0, %s72
      %s73 = sphi 0, %s70
      %s74 = sphi 0, %s73
      %s90 = sphi 0, %s74
      %s98 = sphi 0, %s100
      %s101 = sphi 0, %s98
      %s102 = sphi 0, %s101
      %s118 = sphi 0, %s102
      %s126 = sphi 0, %s128
      %s129 = sphi 0, %s126
      %s130 = sphi 0, %s129
      %s146 = sphi 0, %s130
      %s154 = sphi 0, %s156
      %s157 = sphi 0, %s154
      %s158 = sphi 0, %s157
      %s174 = sphi 0, %s158
      %s182 = sphi 0, %s184
      %s185 = sphi 0, %s182
      %s186 = sphi 0, %s185
      %s202 = sphi 0, %s186
      %s210 = sphi 0, %s212
      %s213 = sphi 0, %s210
      %s214 = sphi 0, %s213
      %s230 = sphi 0, %s214
    $region4: #{tpu_custom_call.1} parent=1 // loop_header_branch
      %28 = sbr.rel (%p26) target = $region8
    $region5: #{tpu_custom_call.1} parent=1 // loop_body
      %s30 = ssub.s32 %s25, 1
      %s31 = ssub.s32 %s25, 2
      %s38 = sadd.s32 1, %s33
      %p39 = scmp.ge.s32.totalorder %s38, 1
      %s40 = scalar_select %p39, 0, %s38
      %s41 = sadd.s32 1, %s32
      %s42 = scalar_select %p39, %s41, %s32
      %p43 = scmp.ge.s32.totalorder %s42, 2
      %s44 = scalar_select %p43, 0, %s42
      %s46 = sadd.s32 %s45, 1
      %p49 = scmp.eq.s32.totalorder %s25, 1
      %p50 = scmp.ne.s32.totalorder %s45, %s47
      %p51 = scmp.eq.s32.totalorder %s25, 0
      %p52 = por %p50, %p51
      %p53 = scmp.ne.s32.totalorder %s45, %s47
      %p54 = scmp.eq.s32.totalorder %s30, 1
      %p55 = por %p53, %p54
      %p56 = scmp.ne.s32.totalorder %s47, %s48
      %p57 = scmp.eq.s32.totalorder %s30, 0
      %p58 = por %p56, %p57
      %p59 = scmp.ne.s32.totalorder %s47, %s48
      %p60 = scmp.eq.s32.totalorder %s31, 1
      %p61 = por %p59, %p60
      %p63 = scmp.ne.s32.totalorder %s48, %s62
      %p64 = scmp.eq.s32.totalorder %s31, 0
      %p65 = por %p63, %p64
      %s66 = ssub.s32 %s32, %s44
      %s67 = ssub.s32 %s33, %s40
      %s68 = sor.u32 %s66, %s67
      %p69 = scmp.eq.s32.totalorder %s68, 0
      %s71 = sadd.s32 %s70, 1
      %s72 = scalar_select %p69, %s70, %s71
      %p75 = pneg %p69
      %p76 = scmp.eq.s32.totalorder %s25, 1
      %p77 = por %p75, %p76
      %p78 = scmp.ne.s32.totalorder %s70, %s73
      %p79 = scmp.eq.s32.totalorder %s25, 0
      %p80 = por %p78, %p79
      %p81 = scmp.ne.s32.totalorder %s70, %s73
      %p82 = scmp.eq.s32.totalorder %s30, 1
      %p83 = por %p81, %p82
      %p84 = scmp.ne.s32.totalorder %s73, %s74
      %p85 = scmp.eq.s32.totalorder %s30, 0
      %p86 = por %p84, %p85
      %p87 = scmp.ne.s32.totalorder %s73, %s74
      %p88 = scmp.eq.s32.totalorder %s31, 1
      %p89 = por %p87, %p88
      %p91 = scmp.ne.s32.totalorder %s74, %s90
      %p92 = scmp.eq.s32.totalorder %s31, 0
      %p93 = por %p91, %p92
      %s94 = ssub.s32 %s32, %s44
      %s95 = ssub.s32 %s33, %s40
      %s96 = sor.u32 %s94, %s95
      %p97 = scmp.eq.s32.totalorder %s96, 0
      %s99 = sadd.s32 %s98, 1
      %s100 = scalar_select %p97, %s98, %s99
      %p103 = pneg %p97
      %p104 = scmp.eq.s32.totalorder %s25, 1
      %p105 = por %p103, %p104
      %p106 = scmp.ne.s32.totalorder %s98, %s101
      %p107 = scmp.eq.s32.totalorder %s25, 0
      %p108 = por %p106, %p107
      %p109 = scmp.ne.s32.totalorder %s98, %s101
      %p110 = scmp.eq.s32.totalorder %s30, 1
      %p111 = por %p109, %p110
      %p112 = scmp.ne.s32.totalorder %s101, %s102
      %p113 = scmp.eq.s32.totalorder %s30, 0
      %p114 = por %p112, %p113
      %p115 = scmp.ne.s32.totalorder %s101, %s102
      %p116 = scmp.eq.s32.totalorder %s31, 1
      %p117 = por %p115, %p116
      %p119 = scmp.ne.s32.totalorder %s102, %s118
      %p120 = scmp.eq.s32.totalorder %s31, 0
      %p121 = por %p119, %p120
      %s122 = ssub.s32 %s32, %s44
      %s123 = ssub.s32 %s33, %s40
      %s124 = sor.u32 %s122, %s123
      %p125 = scmp.eq.s32.totalorder %s124, 0
      %s127 = sadd.s32 %s126, 1
      %s128 = scalar_select %p125, %s126, %s127
      %p131 = pneg %p125
      %p132 = scmp.eq.s32.totalorder %s25, 1
      %p133 = por %p131, %p132
      %p134 = scmp.ne.s32.totalorder %s126, %s129
      %p135 = scmp.eq.s32.totalorder %s25, 0
      %p136 = por %p134, %p135
      %p137 = scmp.ne.s32.totalorder %s126, %s129
      %p138 = scmp.eq.s32.totalorder %s30, 1
      %p139 = por %p137, %p138
      %p140 = scmp.ne.s32.totalorder %s129, %s130
      %p141 = scmp.eq.s32.totalorder %s30, 0
      %p142 = por %p140, %p141
      %p143 = scmp.ne.s32.totalorder %s129, %s130
      %p144 = scmp.eq.s32.totalorder %s31, 1
      %p145 = por %p143, %p144
      %p147 = scmp.ne.s32.totalorder %s130, %s146
      %p148 = scmp.eq.s32.totalorder %s31, 0
      %p149 = por %p147, %p148
      %s150 = ssub.s32 %s32, %s44
      %s151 = ssub.s32 %s33, %s40
      %s152 = sor.u32 %s150, %s151
      %p153 = scmp.eq.s32.totalorder %s152, 0
      %s155 = sadd.s32 %s154, 1
      %s156 = scalar_select %p153, %s154, %s155
      %p159 = pneg %p153
      %p160 = scmp.eq.s32.totalorder %s25, 1
      %p161 = por %p159, %p160
      %p162 = scmp.ne.s32.totalorder %s154, %s157
      %p163 = scmp.eq.s32.totalorder %s25, 0
      %p164 = por %p162, %p163
      %p165 = scmp.ne.s32.totalorder %s154, %s157
      %p166 = scmp.eq.s32.totalorder %s30, 1
      %p167 = por %p165, %p166
      %p168 = scmp.ne.s32.totalorder %s157, %s158
      %p169 = scmp.eq.s32.totalorder %s30, 0
      %p170 = por %p168, %p169
      %p171 = scmp.ne.s32.totalorder %s157, %s158
      %p172 = scmp.eq.s32.totalorder %s31, 1
      %p173 = por %p171, %p172
      %p175 = scmp.ne.s32.totalorder %s158, %s174
      %p176 = scmp.eq.s32.totalorder %s31, 0
      %p177 = por %p175, %p176
      %s178 = ssub.s32 %s32, %s44
      %s179 = ssub.s32 %s33, %s40
      %s180 = sor.u32 %s178, %s179
      %p181 = scmp.eq.s32.totalorder %s180, 0
      %s183 = sadd.s32 %s182, 1
      %s184 = scalar_select %p181, %s182, %s183
      %p187 = pneg %p181
      %p188 = scmp.eq.s32.totalorder %s25, 1
      %p189 = por %p187, %p188
      %p190 = scmp.ne.s32.totalorder %s182, %s185
      %p191 = scmp.eq.s32.totalorder %s25, 0
      %p192 = por %p190, %p191
      %p193 = scmp.ne.s32.totalorder %s182, %s185
      %p194 = scmp.eq.s32.totalorder %s30, 1
      %p195 = por %p193, %p194
      %p196 = scmp.ne.s32.totalorder %s185, %s186
      %p197 = scmp.eq.s32.totalorder %s30, 0
      %p198 = por %p196, %p197
      %p199 = scmp.ne.s32.totalorder %s185, %s186
      %p200 = scmp.eq.s32.totalorder %s31, 1
      %p201 = por %p199, %p200
      %p203 = scmp.ne.s32.totalorder %s186, %s202
      %p204 = scmp.eq.s32.totalorder %s31, 0
      %p205 = por %p203, %p204
      %s206 = ssub.s32 %s32, %s44
      %s207 = ssub.s32 %s33, %s40
      %s208 = sor.u32 %s206, %s207
      %p209 = scmp.eq.s32.totalorder %s208, 0
      %s211 = sadd.s32 %s210, 1
      %s212 = scalar_select %p209, %s210, %s211
      %p215 = pneg %p209
      %p216 = scmp.eq.s32.totalorder %s25, 1
      %p217 = por %p215, %p216
      %p218 = scmp.ne.s32.totalorder %s210, %s213
      %p219 = scmp.eq.s32.totalorder %s25, 0
      %p220 = por %p218, %p219
      %p221 = scmp.ne.s32.totalorder %s210, %s213
      %p222 = scmp.eq.s32.totalorder %s30, 1
      %p223 = por %p221, %p222
      %p224 = scmp.ne.s32.totalorder %s213, %s214
      %p225 = scmp.eq.s32.totalorder %s30, 0
      %p226 = por %p224, %p225
      %p227 = scmp.ne.s32.totalorder %s213, %s214
      %p228 = scmp.eq.s32.totalorder %s31, 1
      %p229 = por %p227, %p228
      %p231 = scmp.ne.s32.totalorder %s214, %s230
      %p232 = scmp.eq.s32.totalorder %s31, 0
      %p233 = por %p231, %p232
      %p234 = scmp.le.s32.totalorder 1, %s25
      %p235 = scmp.lt.s32.totalorder %s25, 3
      %p236 = pnand %p234, %p235
      %p237 = pneg %p236
      // Predicated region
      $region9: #{tpu_custom_call.1} parent=5 // pred_check
        _
      $region10: #{tpu_custom_call.1} parent=5 // pred_check_branch
        %239 = sbr.rel (%p236) target = $region12
      $region11: #{tpu_custom_call.1} parent=5 // pred_region
        %s240 = ssub.s32 %s25, 1
        // Predicated region
        $region13: #{tpu_custom_call.1} parent=11 // pred_check
          %p241 = pneg %p58
        $region14: #{tpu_custom_call.1} parent=11 // pred_check_branch
          %243 = sbr.rel (%p241) target = $region16
        $region15: #{tpu_custom_call.1} parent=11 // pred_region
          %s245 = ssub.s32 16, 16
          %246 = vsyncadd [#allocation5], %s245
          %249 = dma.hbm_to_smem %s0, 16, [#allocation2], [#allocation5]
        $region16: #{tpu_custom_call.1} parent=11 // pred_fallthru
          _
      $region12: #{tpu_custom_call.1} parent=5 // pred_fallthru
        _
      %p250 = scmp.lt.s32.totalorder %s25, 2
      // Predicated region
      $region17: #{tpu_custom_call.1} parent=5 // pred_check
        %p251 = pneg %p250
      $region18: #{tpu_custom_call.1} parent=5 // pred_check_branch
        %253 = sbr.rel (%p251) target = $region20
      $region19: #{tpu_custom_call.1} parent=5 // pred_region
        // Predicated region
        $region21: #{tpu_custom_call.1} parent=19 // pred_check
          %p254 = pneg %p80
        $region22: #{tpu_custom_call.1} parent=19 // pred_check_branch
          %256 = sbr.rel (%p254) target = $region24
        $region23: #{tpu_custom_call.1} parent=19 // pred_region
          %s257 = sand.u32 %s70, 1
          %s258 = scalar_lea.sflag [#allocation3], %s257
          %s259 = sand.u32 %s70, 1
          %s260 = smul.addr %s259, 2
          %s261 = scalar_lea.vmem [#allocation6], %s260
          %s263 = ssub.s32 32, 32
          %264 = vsyncadd %s258, %s263
          %s265 = sadd.s32 %s33, %s32
          %s266 = smul.addr %s265, 32
          %s267 = scalar_lea.hbm %s1, %s266
          %s269 = sshll.u32 %s261, 4
          %s270 = int_to_ptr.vmem [resolvable:$true] %s269
          %272 = dma.hbm_to_vmem [thread:$0]  %s267, 32, %s270, %s258
        $region24: #{tpu_custom_call.1} parent=19 // pred_fallthru
          _
        // Predicated region
        $region25: #{tpu_custom_call.1} parent=19 // pred_check
          %p273 = pneg %p108
        $region26: #{tpu_custom_call.1} parent=19 // pred_check_branch
          %275 = sbr.rel (%p273) target = $region28
        $region27: #{tpu_custom_call.1} parent=19 // pred_region
          %s276 = sand.u32 %s25, 1
          %s277 = scalar_lea.sflag [#allocation8], %s276
          %s278 = sand.u32 %s98, 1
          %s279 = smul.addr %s278, 2
          %s280 = scalar_lea.vmem [#allocation7], %s279
          %s282 = ssub.s32 32, 32
          %283 = vsyncadd %s277, %s282
          %s284 = sadd.s32 %s33, %s32
          %s285 = smul.addr %s284, 32
          %s286 = scalar_lea.hbm %s2, %s285
          %s288 = sshll.u32 %s280, 4
          %s289 = int_to_ptr.vmem [resolvable:$true] %s288
          %291 = dma.hbm_to_vmem [thread:$0]  %s286, 32, %s289, %s277
        $region28: #{tpu_custom_call.1} parent=19 // pred_fallthru
          _
        // Predicated region
        $region29: #{tpu_custom_call.1} parent=19 // pred_check
          %p292 = pneg %p136
        $region30: #{tpu_custom_call.1} parent=19 // pred_check_branch
          %294 = sbr.rel (%p292) target = $region32
        $region31: #{tpu_custom_call.1} parent=19 // pred_region
          %s295 = sand.u32 %s25, 1
          %s296 = scalar_lea.sflag [#allocation8], %s295
          %s297 = sand.u32 %s126, 1
          %s298 = smul.addr %s297, 4
          %s299 = scalar_lea.vmem [#allocation9], %s298
          %s301 = ssub.s32 64, 64
          %302 = vsyncadd %s296, %s301
          %s303 = smul.addr %s32, 2
          %s304 = sadd.s32 %s33, %s303
          %s305 = smul.addr %s304, 32
          %s306 = scalar_lea.hbm %s3, %s305
          %s307 = sshll.u32 %s299, 4
          %s308 = int_to_ptr.vmem [resolvable:$true] %s307
          %313 = dma.hbm_to_vmem [thread:$0]  %s306, 64, %s308, %s296, 32, 32, 2
        $region32: #{tpu_custom_call.1} parent=19 // pred_fallthru
          _
        // Predicated region
        $region33: #{tpu_custom_call.1} parent=19 // pred_check
          %p314 = pneg %p164
        $region34: #{tpu_custom_call.1} parent=19 // pred_check_branch
          %316 = sbr.rel (%p314) target = $region36
        $region35: #{tpu_custom_call.1} parent=19 // pred_region
          %s317 = sand.u32 %s154, 1
          %s318 = scalar_lea.sflag [#allocation11], %s317
          %s319 = sand.u32 %s154, 1
          %s320 = smul.addr %s319, 4
          %s321 = scalar_lea.vmem [#allocation10], %s320
          %s323 = ssub.s32 64, 64
          %324 = vsyncadd %s318, %s323
          %s325 = smul.addr %s32, 2
          %s326 = sadd.s32 %s33, %s325
          %s327 = smul.addr %s326, 32
          %s328 = scalar_lea.hbm %s4, %s327
          %s329 = sshll.u32 %s321, 4
          %s330 = int_to_ptr.vmem [resolvable:$true] %s329
          %335 = dma.hbm_to_vmem [thread:$0]  %s328, 64, %s330, %s318, 32, 32, 2
        $region36: #{tpu_custom_call.1} parent=19 // pred_fallthru
          _
        // Predicated region
        $region37: #{tpu_custom_call.1} parent=19 // pred_check
          %p336 = pneg %p192
        $region38: #{tpu_custom_call.1} parent=19 // pred_check_branch
          %338 = sbr.rel (%p336) target = $region40
        $region39: #{tpu_custom_call.1} parent=19 // pred_region
          %p339 = scmp.lt.s32.totalorder %s32, 1
          %s340 = scalar_select %p339, %s32, 1
          %p341 = scmp.lt.s32.totalorder %s33, 0
          %s342 = scalar_select %p341, %s33, 0
          %s343 = smul.addr %s340, 2
          %s344 = sadd.s32 %s342, %s343
          %s345 = smul.addr %s344, 2
          %s346 = scalar_lea.vmem %s5, %s345
        $region40: #{tpu_custom_call.1} parent=19 // pred_fallthru
          _
      $region20: #{tpu_custom_call.1} parent=5 // pred_fallthru
        _
      %p347 = scmp.le.s32.totalorder 1, %s25
      %p348 = scmp.lt.s32.totalorder %s25, 3
      %p349 = pnand %p347, %p348
      %p350 = pneg %p349
      // Predicated region
      $region41: #{tpu_custom_call.1} parent=5 // pred_check
        _
      $region42: #{tpu_custom_call.1} parent=5 // pred_check_branch
        %352 = sbr.rel (%p349) target = $region44
      $region43: #{tpu_custom_call.1} parent=5 // pred_region
        %s353 = ssub.s32 %s25, 1
        // Predicated region
        $region45: #{tpu_custom_call.1} parent=43 // pred_check
          %p354 = pneg %p58
        $region46: #{tpu_custom_call.1} parent=43 // pred_check_branch
          %356 = sbr.rel (%p354) target = $region48
        $region47: #{tpu_custom_call.1} parent=43 // pred_region
          %357 = dma.done [#allocation5], 16
        $region48: #{tpu_custom_call.1} parent=43 // pred_fallthru
          _
        %s358 = sand.u32 %s73, 1
        %s359 = scalar_lea.sflag [#allocation3], %s358
        %s360 = sand.u32 %s73, 1
        %s361 = smul.addr %s360, 2
        %s362 = scalar_lea.vmem [#allocation6], %s361
        // Predicated region
        $region49: #{tpu_custom_call.1} parent=43 // pred_check
          %p363 = pneg %p86
        $region50: #{tpu_custom_call.1} parent=43 // pred_check_branch
          %365 = sbr.rel (%p363) target = $region52
        $region51: #{tpu_custom_call.1} parent=43 // pred_region
          %366 = dma.done %s359, 32
        $region52: #{tpu_custom_call.1} parent=43 // pred_fallthru
          _
        %s367 = sand.u32 %s30, 1
        %s368 = scalar_lea.sflag [#allocation8], %s367
        %s369 = sand.u32 %s101, 1
        %s370 = smul.addr %s369, 2
        %s371 = scalar_lea.vmem [#allocation7], %s370
        // Predicated region
        $region53: #{tpu_custom_call.1} parent=43 // pred_check
          %p372 = pneg %p114
        $region54: #{tpu_custom_call.1} parent=43 // pred_check_branch
          %374 = sbr.rel (%p372) target = $region56
        $region55: #{tpu_custom_call.1} parent=43 // pred_region
          %375 = dma.done %s368, 32
        $region56: #{tpu_custom_call.1} parent=43 // pred_fallthru
          _
        %s376 = sand.u32 %s30, 1
        %s377 = scalar_lea.sflag [#allocation8], %s376
        %s378 = sand.u32 %s129, 1
        %s379 = smul.addr %s378, 4
        %s380 = scalar_lea.vmem [#allocation9], %s379
        // Predicated region
        $region57: #{tpu_custom_call.1} parent=43 // pred_check
          %p381 = pneg %p142
        $region58: #{tpu_custom_call.1} parent=43 // pred_check_branch
          %383 = sbr.rel (%p381) target = $region60
        $region59: #{tpu_custom_call.1} parent=43 // pred_region
          %384 = dma.done %s377, 64
        $region60: #{tpu_custom_call.1} parent=43 // pred_fallthru
          _
        %s385 = sand.u32 %s157, 1
        %s386 = scalar_lea.sflag [#allocation11], %s385
        %s387 = sand.u32 %s157, 1
        %s388 = smul.addr %s387, 4
        %s389 = scalar_lea.vmem [#allocation10], %s388
        // Predicated region
        $region61: #{tpu_custom_call.1} parent=43 // pred_check
          %p390 = pneg %p170
        $region62: #{tpu_custom_call.1} parent=43 // pred_check_branch
          %392 = sbr.rel (%p390) target = $region64
        $region63: #{tpu_custom_call.1} parent=43 // pred_region
          %393 = dma.done %s386, 64
        $region64: #{tpu_custom_call.1} parent=43 // pred_fallthru
          _
        %394 = sfence
        %p395 = pneg %p58
        %p396 = pneg %p55
        %s397 = sand.u32 %s73, 1
        %s398 = scalar_lea.sflag [#allocation3], %s397
        %s399 = sand.u32 %s73, 1
        %s400 = smul.addr %s399, 2
        %s401 = scalar_lea.vmem [#allocation6], %s400
        %p402 = pneg %p86
        %p403 = pneg %p83
        %s404 = sand.u32 %s30, 1
        %s405 = scalar_lea.sflag [#allocation8], %s404
        %s406 = sand.u32 %s101, 1
        %s407 = smul.addr %s406, 2
        %s408 = scalar_lea.vmem [#allocation7], %s407
        %p409 = pneg %p114
        %p410 = pneg %p111
        %s411 = sand.u32 %s30, 1
        %s412 = scalar_lea.sflag [#allocation8], %s411
        %s413 = sand.u32 %s129, 1
        %s414 = smul.addr %s413, 4
        %s415 = scalar_lea.vmem [#allocation9], %s414
        %p416 = pneg %p142
        %p417 = pneg %p139
        %s418 = sand.u32 %s157, 1
        %s419 = scalar_lea.sflag [#allocation11], %s418
        %s420 = sand.u32 %s157, 1
        %s421 = smul.addr %s420, 4
        %s422 = scalar_lea.vmem [#allocation10], %s421
        %p423 = pneg %p170
        %p424 = pneg %p167
        %p425 = scmp.lt.s32.totalorder %s34, 1
        %s426 = scalar_select %p425, %s34, 1
        %p427 = scmp.lt.s32.totalorder %s35, 0
        %s428 = scalar_select %p427, %s35, 0
        %s429 = smul.addr %s426, 2
        %s430 = sadd.s32 %s428, %s429
        %s431 = smul.addr %s430, 2
        %s432 = scalar_lea.vmem %s5, %s431
        %p433 = pneg %p198
        %p434 = pneg %p195
        %p435 = pneg %p226
        %p436 = pneg %p223
        %s437 = sand.u32 %s213, 1
        %s438 = scalar_lea.sflag [#allocation4], %s437
        %s439 = sand.u32 %s213, 1
        %s440 = smul.addr %s439, 2
        %s441 = scalar_lea.vmem [#allocation12], %s440
        %p442 = scmp.lt.s32.totalorder %s34, 1
        %s443 = scalar_select %p442, %s34, 1
        %p444 = scmp.lt.s32.totalorder %s35, 0
        %s445 = scalar_select %p444, %s35, 0
        %s446 = smul.addr %s443, 2
        %s447 = sadd.s32 %s445, %s446
        %s448 = smul.addr %s447, 2
        %s449 = scalar_lea.vmem %s5, %s448
        %v450 = vld [vmem:[%s362] sm:$0x3]
        %v451 = vld [vmem:[%s371] sm:$0x3]
        %v452 = vld [vmem:[%s380] sm:$0x3]
        %s453 = scalar_lea.vmem %s380, 2 [#allocation9]
        %v454 = vld [vmem:[%s453] sm:$0x3]
        %v455 = vmul.f32 %v454, %v454
        %v456 = vmax.f32 %v455, 1e-10
        %v457 = vsub.f32 %v452, %v450
        %v458 = vmul.f32 %v457, %v457
        %v459 = vmul.f32 %v456, 2.0
        %v460 = vrcp.pop %v459
        %v461 = vmul.f32 %v458, %v460
        %v462 = vlog2.pop %v456
        %v463 = vmul.f32 %v462, 0.6931472
        %v464 = vmul.f32 %v463, 0.5
        %v465 = vadd.f32 %v461, %v464
        %v466 = vmul.f32 %v465, %v451
        %s467 = sld [smem:[#allocation2]]
        %v468 = vstv %s467
        %v469 = vmul.f32 %v468, %v466
        %v470 = vadd.f32 %v469, 0.0
        %v471 = vld [vmem:[%s389] sm:$0x3]
        %s472 = scalar_lea.vmem %s389, 2 [#allocation10]
        %v473 = vld [vmem:[%s472] sm:$0x3]
        %v474 = vmul.f32 %v473, %v473
        %v475 = vmax.f32 %v474, 1e-10
        %v476 = vsub.f32 %v471, %v450
        %v477 = vmul.f32 %v476, %v476
        %v478 = vmul.f32 %v475, 2.0
        %v479 = vrcp.pop %v478
        %v480 = vmul.f32 %v477, %v479
        %v481 = vlog2.pop %v475
        %v482 = vmul.f32 %v481, 0.6931472
        %v483 = vmul.f32 %v482, 0.5
        %v484 = vadd.f32 %v480, %v483
        %v485 = vmul.f32 %v484, %v451
        %s486 = sld [smem:[#allocation2 + $0x1]]
        %v487 = vstv %s486
        %v488 = vmul.f32 %v487, %v485
        %v489 = vadd.f32 %v470, %v488
        %v490 = vld [vmem:[%s449] sm:$0x3]
        %s491 = scalar_lea.vmem %s449, 2
        %v492 = vld [vmem:[%s491] sm:$0x3]
        %v493 = vmul.f32 %v492, %v492
        %v494 = vmax.f32 %v493, 1e-10
        %v495 = vsub.f32 %v490, %v450
        %v496 = vmul.f32 %v495, %v495
        %v497 = vmul.f32 %v494, 2.0
        %v498 = vrcp.pop %v497
        %v499 = vmul.f32 %v496, %v498
        %v500 = vlog2.pop %v494
        %v501 = vmul.f32 %v500, 0.6931472
        %v502 = vmul.f32 %v501, 0.5
        %v503 = vadd.f32 %v499, %v502
        %v504 = vmul.f32 %v503, %v451
        %s505 = sld [smem:[#allocation2 + $0x2]]
        %v506 = vstv %s505
        %v507 = vmul.f32 %v506, %v504
        %v508 = vadd.f32 %v489, %v507
        %v509 = vadd.f32 %v508, 0.0
        %510 = vst [vmem:[%s441] sm:$0x3] %v509
        %s511 = sand.u32 %s213, 1
        %s512 = scalar_lea.sflag [#allocation4], %s511
        %s513 = sand.u32 %s213, 1
        %s514 = smul.addr %s513, 2
        %s515 = scalar_lea.vmem [#allocation12], %s514
        // Predicated region
        $region65: #{tpu_custom_call.1} parent=43 // pred_check
          %p516 = pneg %p223
        $region66: #{tpu_custom_call.1} parent=43 // pred_check_branch
          %518 = sbr.rel (%p516) target = $region68
        $region67: #{tpu_custom_call.1} parent=43 // pred_region
          %s520 = ssub.s32 32, 32
          %521 = vsyncadd %s512, %s520
          %s522 = sadd.s32 %s35, %s34
          %s523 = smul.addr %s522, 32
          %s524 = scalar_lea.hbm %s6, %s523
          %s526 = sshll.u32 %s515, 4
          %s527 = int_to_ptr.vmem [resolvable:$true] %s526
          %529 = dma.vmem_to_hbm [thread:$0]  %s527, 32, %s524, %s512
        $region68: #{tpu_custom_call.1} parent=43 // pred_fallthru
          _
      $region44: #{tpu_custom_call.1} parent=5 // pred_fallthru
        _
      %p530 = scmp.le.s32.totalorder 2, %s25
      // Predicated region
      $region69: #{tpu_custom_call.1} parent=5 // pred_check
        %p531 = pneg %p530
      $region70: #{tpu_custom_call.1} parent=5 // pred_check_branch
        %533 = sbr.rel (%p531) target = $region72
      $region71: #{tpu_custom_call.1} parent=5 // pred_region
        %s534 = ssub.s32 %s25, 2
        // Predicated region
        $region73: #{tpu_custom_call.1} parent=71 // pred_check
          %p535 = pneg %p229
        $region74: #{tpu_custom_call.1} parent=71 // pred_check_branch
          %537 = sbr.rel (%p535) target = $region76
        $region75: #{tpu_custom_call.1} parent=71 // pred_region
          %s538 = sand.u32 %s214, 1
          %s539 = scalar_lea.sflag [#allocation4], %s538
          %s540 = sand.u32 %s214, 1
          %s541 = smul.addr %s540, 2
          %s542 = scalar_lea.vmem [#allocation12], %s541
          %543 = dma.done %s539, 32
        $region76: #{tpu_custom_call.1} parent=71 // pred_fallthru
          _
      $region72: #{tpu_custom_call.1} parent=5 // pred_fallthru
        _
    $region6: #{tpu_custom_call.1} parent=1 // loop_footer
      %s29 = sadd.s32 1, %s25
    $region7: #{tpu_custom_call.1} parent=1 // loop_footer_branch
      %24 = sbr.rel target = $region3
    $region8: #{tpu_custom_call.1} parent=1 // loop_exit
      _
    %544 = vsyncpa [#allocation3], 1
    %s545 = scalar_lea.sflag [#allocation3], 1
    %546 = vsyncpa %s545, 1
    %547 = vsyncpa [#allocation8], 1
    %s548 = scalar_lea.sflag [#allocation8], 1
    %549 = vsyncpa %s548, 1
    %550 = vsyncpa [#allocation11], 1
    %s551 = scalar_lea.sflag [#allocation11], 1
    %552 = vsyncpa %s551, 1
    %553 = vsyncpa [#allocation4], 1
    %s554 = scalar_lea.sflag [#allocation4], 1
    %555 = vsyncpa %s554, 1
    %556 = vsyncpa [#allocation5], 1
    %s557 = scalar_lea.sflag [#allocation5], 1
    %558 = vsyncpa %s557, 1

</llo_original>
